<compile_context>
chip_gen: v6e
topology: v6e:2x2x1
jax: 0.10.0
libtpu: 0.0.40
codegen_flags: <defaults>
</compile_context>

<pallas_src>
import math
import jax
import jax.numpy as jnp
from jax import lax
from jax.experimental import pallas as pl
from jax.experimental.pallas import tpu as pltpu

# ---------------- config (small shapes) ----------------
B = 2
IMG = 16              # image_size
C_FEAT = 32           # out_ext_channels (stand-in for 2048)
FH = FW = 4           # backbone feature spatial size
PATCH = 2             # patch_size
RATIO = 1             # ratio chosen so patch_dim is consistent with conv_attn=False
N_PATCH = (FH // PATCH) * (FW // PATCH)          # num_patches = 4
D_IN = (C_FEAT // RATIO) * PATCH * PATCH         # patch_dim / in_dim = 128
INNER = 32            # inner_ca_dim (CrossAttention inner dim)
DIM = 32              # self.dim  (embedding output)
MLP_DIM = 64          # self.mlp_dim
NUM_CLASSES = 1
FUSION_W = 0.5        # float(version.split('-')[-1]) for 'ca-fcat-0.5'
BN = B * N_PATCH      # batch-folded token count = 8 (one full sublane tile)

assert INNER == DIM, "bf16 weight slab stacks wq/wk/wemb halves on one lane width"
assert B <= 8, "pooled rows / output block assume at most 8 samples per invocation"

# ---- constant-slab row layout (every slice starts at lane 0; wh region 8-row aligned) ----
ROW_MASK = 0                 # (BN, BN)      additive block-diagonal attention mask
ROW_POOL = 8                 # (8,  BN)      0/1 per-sample pooling matrix (rows >= B zero)
ROW_WH   = 16                # (DIM, MLP_DIM) hidden weight, pre-scaled by 1/N_PATCH
ROW_BEMB = ROW_WH + DIM      # (1, DIM)
ROW_BH   = ROW_BEMB + 1      # (1, MLP_DIM)
ROW_WO   = ROW_BH + 1        # (1, MLP_DIM)  head weight, transposed
ROW_BO   = ROW_WO + 1        # (1, 1)
C_ROWS = ((ROW_BO + 1 + 7) // 8) * 8
C_COLS = 128
OUT_ROWS = 8                 # lane-dense padded output block (sliced to (B, 1) outside)


# ---------------- Pallas kernel (single invocation, batch-folded) ----------------
def dual_cnn_vit_kernel(xq_ref, xk_ref, fv_ref, w_ref, c_ref, out_ref):
    # w_ref (bf16), sublane-stacked so every slice starts at lane 0:
    #   rows [0,        D_IN)   to_q weight   (1/sqrt(INNER) scale folded in)
    #   rows [D_IN,   2*D_IN)   to_k weight
    #   rows [2*D_IN, 3*D_IN)   embedding weight, rgb half of 'cat'
    #   rows [3*D_IN, 4*D_IN)   embedding weight, attn half (0.5 fusion weight folded in)
    xq = xq_ref[...]                      # (BN, D_IN) bf16  rgb_query_vectors
    xk = xk_ref[...]                      # (BN, D_IN) bf16  ifreq_key_vectors
    fv = fv_ref[...]                      # (BN, D_IN) bf16  freq_value_vectors

    # CrossAttention q/k projections: two small MXU pushes, outputs at lanes [0, INNER).
    q = jnp.dot(xq, w_ref[0:D_IN, :], preferred_element_type=jnp.float32)          # (BN, INNER)
    k = jnp.dot(xk, w_ref[D_IN:2 * D_IN, :], preferred_element_type=jnp.float32)   # (BN, INNER)

    # Batch-folded scaled-dot softmax; the precomputed block-diagonal additive mask
    # (one vadd) keeps attention inside each sample's N_PATCH tokens.
    # TODO(synk): at large folded batch, restructure as per-sample (B, N, N) attention so
    # the (BN, BN) score matrix does not grow quadratically in B.
    s = lax.dot_general(q, k, (((1,), (1,)), ((), ())),
                        preferred_element_type=jnp.float32)                         # (BN, BN)
    s = s + c_ref[ROW_MASK:ROW_MASK + BN, 0:BN]
    s = s - jnp.max(s, axis=-1, keepdims=True)
    e = jnp.exp(s)
    attn = e * pl.reciprocal(jnp.sum(e, axis=-1, keepdims=True), approx=True)

    # attn_out = bmm(attn_weight, freq_value_vectors)
    attn_out = jnp.dot(attn.astype(jnp.bfloat16), fv,
                       preferred_element_type=jnp.float32)                          # (BN, D_IN)

    # fusion ('cat') + embedding Linear as a split matmul (fusion weight folded offline).
    emb = (jnp.dot(xq, w_ref[2 * D_IN:3 * D_IN, :], preferred_element_type=jnp.float32)
           + jnp.dot(attn_out.astype(jnp.bfloat16), w_ref[3 * D_IN:4 * D_IN, :],
                     preferred_element_type=jnp.float32)
           + c_ref[ROW_BEMB:ROW_BEMB + 1, 0:DIM])                                   # (BN, DIM)

    # classifier == 'mlp': per-sample mean over tokens via the precomputed 0/1 pooling
    # matmul (1/N_PATCH folded into wh), then Linear -> ReLU -> Linear -> sigmoid.
    pooled = jnp.dot(c_ref[ROW_POOL:ROW_POOL + 8, 0:BN], emb,
                     preferred_element_type=jnp.float32)                            # (8, DIM)
    h = (jnp.dot(pooled, c_ref[ROW_WH:ROW_WH + DIM, 0:MLP_DIM],
                 preferred_element_type=jnp.float32)
         + c_ref[ROW_BH:ROW_BH + 1, 0:MLP_DIM])
    h = jnp.maximum(h, 0.0)                                                         # (8, MLP_DIM)

    # 64 -> 1 head: broadcast multiply + lane reduce instead of an N=1 MXU matmul.
    o = (jnp.sum(h * c_ref[ROW_WO:ROW_WO + 1, 0:MLP_DIM], axis=-1, keepdims=True)
         + c_ref[ROW_BO:ROW_BO + 1, 0:1])                                           # (8, 1)

    # Exact sigmoid for the final probability (no approx reciprocal on the output).
    prob = 1.0 / (1.0 + jnp.exp(-o))

    # One unmasked lane-dense store; caller slices [:B, :NUM_CLASSES].
    out_ref[...] = jnp.broadcast_to(prob, (OUT_ROWS, C_COLS))


# ---------------- one-time parameter prep (offline packing / weight folding) ----------------
def prepare_kernel_params(params):
    # bf16 weight slab: wq (scaled), wk, wemb top half, 0.5*wemb bottom half, sublane-stacked.
    wbig = jnp.concatenate(
        [params["wq"] * (1.0 / math.sqrt(INNER)),
         params["wk"],
         params["wemb"][0:D_IN, :],
         FUSION_W * params["wemb"][D_IN:2 * D_IN, :]],
        axis=0).astype(jnp.bfloat16)                                   # (4*D_IN, DIM)

    # f32 constant slab: mask, pool, wh/N_PATCH, biases, transposed head weight.
    cst = jnp.zeros((C_ROWS, C_COLS), jnp.float32)
    tok = jnp.arange(BN) // N_PATCH
    mask = jnp.where(tok[:, None] == tok[None, :], 0.0, -1e30).astype(jnp.float32)
    cst = cst.at[ROW_MASK:ROW_MASK + BN, 0:BN].set(mask)
    pool01 = (jnp.arange(8)[:, None] == tok[None, :]).astype(jnp.float32)   # rows >= B are 0
    cst = cst.at[ROW_POOL:ROW_POOL + 8, 0:BN].set(pool01)
    cst = cst.at[ROW_WH:ROW_WH + DIM, 0:MLP_DIM].set(params["wh"] / N_PATCH)
    cst = cst.at[ROW_BEMB, 0:DIM].set(params["bemb"][0])
    cst = cst.at[ROW_BH, 0:MLP_DIM].set(params["bh"][0])
    cst = cst.at[ROW_WO, 0:MLP_DIM].set(params["wo"][:, 0])
    cst = cst.at[ROW_BO, 0].set(params["bo"][0, 0])
    return {"wbig": wbig, "cst": cst}


# ---------------- JAX glue: backbone / ifft / batchnorm / patch flatten ----------------
def preprocess(rgb_imgs, freq_imgs, params):
    # TODO(synk): real module uses a pretrained Xception/EfficientNet backbone; replaced
    # here by a single deterministic strided conv per branch producing (B, C_FEAT, 4, 4).
    rgb_feat = lax.conv_general_dilated(
        rgb_imgs, params["conv_rgb"], (4, 4), "VALID",
        dimension_numbers=("NCHW", "OIHW", "NCHW"))
    freq_feat = lax.conv_general_dilated(
        freq_imgs, params["conv_freq"], (4, 4), "VALID",
        dimension_numbers=("NCHW", "OIHW", "NCHW"))

    # ifft branch: log(|ifft2(ifftshift(x))| + 1e-10), then BatchNorm2d (training-mode
    # batch stats, weight=1, bias=0, eps=1e-5).  FFT/BN are glue, not the hot path.
    ifreq = jnp.log(jnp.abs(jnp.fft.ifft2(jnp.fft.ifftshift(freq_feat))) + 1e-10)
    mean = jnp.mean(ifreq, axis=(0, 2, 3), keepdims=True)
    var = jnp.var(ifreq, axis=(0, 2, 3), keepdims=True)
    ifreq = (ifreq - mean) / jnp.sqrt(var + 1e-5)

    # flatten_type == 'patch':  'b c (h p1) (w p2) -> b (h w) (p1 p2 c)'
    # TODO(synk): at production sizes this rearrange should fold into the kernel's input
    # DMA (BlockSpec index_map / pltpu.einshape on NCHW blocks) to kill the HBM round-trip.
    def to_vectors(f):
        Bb, C, H, W = f.shape
        f = f.reshape(Bb, C, H // PATCH, PATCH, W // PATCH, PATCH)
        f = jnp.transpose(f, (0, 2, 4, 3, 5, 1))        # b h w p1 p2 c
        return f.reshape(Bb, (H // PATCH) * (W // PATCH), PATCH * PATCH * C)

    xq = to_vectors(rgb_feat).astype(jnp.float32)       # rgb_query_vectors
    xk = to_vectors(ifreq).astype(jnp.float32)          # ifreq_key_vectors
    fv = to_vectors(freq_feat).astype(jnp.float32)      # freq_value_vectors
    # CrossAttention's to_v path ('out') is dead code in the module forward
    # (only attn_weight is used), so ifreq_value_vectors / to_v are skipped.
    return xq, xk, fv


@jax.jit
def dual_forward(rgb_imgs, freq_imgs, params, kparams):
    xq, xk, fv = preprocess(rgb_imgs, freq_imgs, params)

    # Batch-fold tokens to (8, 128) slabs; bf16 halves the activation DMA bytes feeding
    # the kernel (all VPU/EUP math inside stays f32).  No host-side concat of xq/xk.
    xq = xq.reshape(BN, D_IN).astype(jnp.bfloat16)
    xk = xk.reshape(BN, D_IN).astype(jnp.bfloat16)
    fv = fv.reshape(BN, D_IN).astype(jnp.bfloat16)

    vmem = pl.BlockSpec(memory_space=pltpu.MemorySpace.VMEM)
    # TODO(synk): at production batch sizes, add a leading 'parallel' grid axis
    # (dimension_semantics) so samples shard across v7x's two TensorCores and the
    # projection matmuls reach M>=256 rows per invocation; re-derive VMEM budget for
    # v7x's 64 MiB with vmem_limit_bytes.
    out_pad = pl.pallas_call(
        dual_cnn_vit_kernel,
        out_shape=jax.ShapeDtypeStruct((OUT_ROWS, C_COLS), jnp.float32),
        in_specs=[vmem] * 5,
        out_specs=vmem,
    )(xq, xk, fv, kparams["wbig"], kparams["cst"])
    return out_pad[:B, :NUM_CLASSES]                                 # (B, NUM_CLASSES)


# ---------------- pure-JAX reference of the kernel math (un-fused f32 weights) ----------------
def reference(xq, xk, fv, params):
    q = (xq @ params["wq"]) / math.sqrt(INNER)
    k = xk @ params["wk"]
    attn = jax.nn.softmax(jnp.einsum("bnd,bmd->bnm", q, k), axis=-1)
    attn_out = jnp.einsum("bnm,bmd->bnd", attn, fv)
    fusion = jnp.concatenate([xq, FUSION_W * attn_out], axis=-1)
    emb = fusion @ params["wemb"] + params["bemb"][0]
    x = emb.mean(axis=1)
    h = jax.nn.relu(x @ params["wh"] + params["bh"][0])
    o = h @ params["wo"] + params["bo"][0]
    return jax.nn.sigmoid(o)


if __name__ == "__main__":
    key = jax.random.PRNGKey(0)
    ks = jax.random.split(key, 12)
    # Deterministic synthetic parameters; weights stored transposed (in, out) so the
    # kernel computes x @ W directly (PyTorch Linear does x @ W.T).
    params = {
        "conv_rgb":  0.10 * jax.random.normal(ks[0], (C_FEAT, 3, 4, 4), jnp.float32),
        "conv_freq": 0.10 * jax.random.normal(ks[1], (C_FEAT, 1, 4, 4), jnp.float32),
        "wq":   0.05 * jax.random.normal(ks[2], (D_IN, INNER), jnp.float32),
        "wk":   0.05 * jax.random.normal(ks[3], (D_IN, INNER), jnp.float32),
        "wemb": 0.05 * jax.random.normal(ks[4], (2 * D_IN, DIM), jnp.float32),
        "bemb": 0.05 * jax.random.normal(ks[5], (1, DIM), jnp.float32),
        "wh":   0.05 * jax.random.normal(ks[6], (DIM, MLP_DIM), jnp.float32),
        "bh":   0.05 * jax.random.normal(ks[7], (1, MLP_DIM), jnp.float32),
        "wo":   0.05 * jax.random.normal(ks[8], (MLP_DIM, NUM_CLASSES), jnp.float32),
        "bo":   0.05 * jax.random.normal(ks[9], (1, NUM_CLASSES), jnp.float32),
    }
    kparams = prepare_kernel_params(params)     # one-time offline packing / folding

    rgb_imgs = jax.random.normal(ks[10], (B, 3, IMG, IMG), jnp.float32)
    freq_imgs = jax.random.normal(ks[11], (B, 1, IMG, IMG), jnp.float32)

    out = jax.block_until_ready(dual_forward(rgb_imgs, freq_imgs, params, kparams))
    assert out.shape == (B, NUM_CLASSES)

    xq, xk, fv = preprocess(rgb_imgs, freq_imgs, params)
    ref = reference(xq, xk, fv, params)
    # tolerance covers bf16 MXU inputs + approx reciprocal on the softmax denominator
    # (final sigmoid is exact)
    assert jnp.allclose(out, ref, rtol=3e-3, atol=3e-3), (out, ref)

    print("KERNEL_OK")
</pallas_src>

<mosaic_0001>
module attributes {stable_mosaic.version = 11 : i64} {
  func.func @dual_cnn_vit_kernel(%arg0: memref<8x128xbf16, #tpu.memory_space<vmem>>, %arg1: memref<8x128xbf16, #tpu.memory_space<vmem>>, %arg2: memref<8x128xbf16, #tpu.memory_space<vmem>>, %arg3: memref<512x32xbf16, #tpu.memory_space<vmem>>, %arg4: memref<56x128xf32, #tpu.memory_space<vmem>>, %arg5: memref<8x128xf32, #tpu.memory_space<vmem>>) attributes {dimension_semantics = [], scalar_prefetch = 0 : i64, scratch_operands = 0 : i64, tpu.core_type = #tpu.core_type<tc>} {
    %c0 = arith.constant 0 : index
    %c0_0 = arith.constant 0 : index
    %0 = vector.load %arg0[%c0, %c0_0] : memref<8x128xbf16, #tpu.memory_space<vmem>>, vector<8x128xbf16>
    %c0_1 = arith.constant 0 : index
    %c0_2 = arith.constant 0 : index
    %1 = vector.load %arg1[%c0_1, %c0_2] : memref<8x128xbf16, #tpu.memory_space<vmem>>, vector<8x128xbf16>
    %c0_3 = arith.constant 0 : index
    %c0_4 = arith.constant 0 : index
    %2 = vector.load %arg2[%c0_3, %c0_4] : memref<8x128xbf16, #tpu.memory_space<vmem>>, vector<8x128xbf16>
    %c0_5 = arith.constant 0 : index
    %c0_6 = arith.constant 0 : index
    %3 = vector.load %arg3[%c0_5, %c0_6] : memref<512x32xbf16, #tpu.memory_space<vmem>>, vector<128x32xbf16>
    %cst = arith.constant dense<0.000000e+00> : vector<8x32xf32>
    %4 = tpu.matmul %0, %3, %cst {dimension_numbers = #tpu.dot_dimension_numbers<[1], [0], [0], [1], [0, 0, 1, 1], [], []>} : vector<8x128xbf16>, vector<128x32xbf16>, vector<8x32xf32> -> vector<8x32xf32>
    %c128 = arith.constant 128 : index
    %c0_7 = arith.constant 0 : index
    %5 = vector.load %arg3[%c128, %c0_7] : memref<512x32xbf16, #tpu.memory_space<vmem>>, vector<128x32xbf16>
    %cst_8 = arith.constant dense<0.000000e+00> : vector<8x32xf32>
    %6 = tpu.matmul %1, %5, %cst_8 {dimension_numbers = #tpu.dot_dimension_numbers<[1], [0], [0], [1], [0, 0, 1, 1], [], []>} : vector<8x128xbf16>, vector<128x32xbf16>, vector<8x32xf32> -> vector<8x32xf32>
    %cst_9 = arith.constant dense<0.000000e+00> : vector<8x8xf32>
    %7 = tpu.matmul %4, %6, %cst_9 {dimension_numbers = #tpu.dot_dimension_numbers<[1], [1], [0], [0], [0, 0, 1, 0], [], []>} : vector<8x32xf32>, vector<8x32xf32>, vector<8x8xf32> -> vector<8x8xf32>
    %c0_10 = arith.constant 0 : index
    %c0_11 = arith.constant 0 : index
    %8 = vector.load %arg4[%c0_10, %c0_11] : memref<56x128xf32, #tpu.memory_space<vmem>>, vector<8x8xf32>
    %9 = arith.addf %7, %8 : vector<8x8xf32>
    %cst_12 = arith.constant dense<0xFF800000> : vector<8xf32>
    %10 = vector.multi_reduction <maximumf>, %9, %cst_12 [1] : vector<8x8xf32> to vector<8xf32>
    %11 = vector.shape_cast %10 : vector<8xf32> to vector<8x1xf32>
    %12 = vector.broadcast %11 : vector<8x1xf32> to vector<8x8xf32>
    %13 = arith.subf %9, %12 : vector<8x8xf32>
    %14 = math.exp %13 : vector<8x8xf32>
    %cst_13 = arith.constant dense<0.000000e+00> : vector<8xf32>
    %15 = vector.multi_reduction <add>, %14, %cst_13 [1] : vector<8x8xf32> to vector<8xf32>
    %16 = vector.shape_cast %15 : vector<8xf32> to vector<8x1xf32>
    %17 = tpu.reciprocal %16 {approx = true} : vector<8x1xf32> -> vector<8x1xf32>
    %18 = vector.broadcast %17 : vector<8x1xf32> to vector<8x8xf32>
    %19 = arith.mulf %14, %18 : vector<8x8xf32>
    %20 = arith.truncf %19 : vector<8x8xf32> to vector<8x8xbf16>
    %cst_14 = arith.constant dense<0.000000e+00> : vector<8x128xf32>
    %21 = tpu.matmul %20, %2, %cst_14 {dimension_numbers = #tpu.dot_dimension_numbers<[1], [0], [0], [1], [0, 0, 1, 1], [], []>} : vector<8x8xbf16>, vector<8x128xbf16>, vector<8x128xf32> -> vector<8x128xf32>
    %c256 = arith.constant 256 : index
    %c0_15 = arith.constant 0 : index
    %22 = vector.load %arg3[%c256, %c0_15] : memref<512x32xbf16, #tpu.memory_space<vmem>>, vector<128x32xbf16>
    %cst_16 = arith.constant dense<0.000000e+00> : vector<8x32xf32>
    %23 = tpu.matmul %0, %22, %cst_16 {dimension_numbers = #tpu.dot_dimension_numbers<[1], [0], [0], [1], [0, 0, 1, 1], [], []>} : vector<8x128xbf16>, vector<128x32xbf16>, vector<8x32xf32> -> vector<8x32xf32>
    %24 = arith.truncf %21 : vector<8x128xf32> to vector<8x128xbf16>
    %c384 = arith.constant 384 : index
    %c0_17 = arith.constant 0 : index
    %25 = vector.load %arg3[%c384, %c0_17] : memref<512x32xbf16, #tpu.memory_space<vmem>>, vector<128x32xbf16>
    %cst_18 = arith.constant dense<0.000000e+00> : vector<8x32xf32>
    %26 = tpu.matmul %24, %25, %cst_18 {dimension_numbers = #tpu.dot_dimension_numbers<[1], [0], [0], [1], [0, 0, 1, 1], [], []>} : vector<8x128xbf16>, vector<128x32xbf16>, vector<8x32xf32> -> vector<8x32xf32>
    %27 = arith.addf %23, %26 : vector<8x32xf32>
    %c48 = arith.constant 48 : index
    %c0_19 = arith.constant 0 : index
    %28 = vector.load %arg4[%c48, %c0_19] : memref<56x128xf32, #tpu.memory_space<vmem>>, vector<1x32xf32>
    %29 = vector.broadcast %28 : vector<1x32xf32> to vector<8x32xf32>
    %30 = arith.addf %27, %29 : vector<8x32xf32>
    %c8 = arith.constant 8 : index
    %c0_20 = arith.constant 0 : index
    %31 = vector.load %arg4[%c8, %c0_20] : memref<56x128xf32, #tpu.memory_space<vmem>>, vector<8x8xf32>
    %cst_21 = arith.constant dense<0.000000e+00> : vector<8x32xf32>
    %32 = tpu.matmul %31, %30, %cst_21 {dimension_numbers = #tpu.dot_dimension_numbers<[1], [0], [0], [1], [0, 0, 1, 1], [], []>} : vector<8x8xf32>, vector<8x32xf32>, vector<8x32xf32> -> vector<8x32xf32>
    %c16 = arith.constant 16 : index
    %c0_22 = arith.constant 0 : index
    %33 = vector.load %arg4[%c16, %c0_22] : memref<56x128xf32, #tpu.memory_space<vmem>>, vector<32x64xf32>
    %cst_23 = arith.constant dense<0.000000e+00> : vector<8x64xf32>
    %34 = tpu.matmul %32, %33, %cst_23 {dimension_numbers = #tpu.dot_dimension_numbers<[1], [0], [0], [1], [0, 0, 1, 1], [], []>} : vector<8x32xf32>, vector<32x64xf32>, vector<8x64xf32> -> vector<8x64xf32>
    %c49 = arith.constant 49 : index
    %c0_24 = arith.constant 0 : index
    %35 = vector.load %arg4[%c49, %c0_24] : memref<56x128xf32, #tpu.memory_space<vmem>>, vector<1x64xf32>
    %36 = vector.broadcast %35 : vector<1x64xf32> to vector<8x64xf32>
    %37 = arith.addf %34, %36 : vector<8x64xf32>
    %cst_25 = arith.constant 0.000000e+00 : f32
    %38 = vector.broadcast %cst_25 : f32 to vector<8x64xf32>
    %39 = arith.maximumf %37, %38 : vector<8x64xf32>
    %c50 = arith.constant 50 : index
    %c0_26 = arith.constant 0 : index
    %40 = vector.load %arg4[%c50, %c0_26] : memref<56x128xf32, #tpu.memory_space<vmem>>, vector<1x64xf32>
    %41 = vector.broadcast %40 : vector<1x64xf32> to vector<8x64xf32>
    %42 = arith.mulf %39, %41 : vector<8x64xf32>
    %cst_27 = arith.constant dense<0.000000e+00> : vector<8xf32>
    %43 = vector.multi_reduction <add>, %42, %cst_27 [1] : vector<8x64xf32> to vector<8xf32>
    %44 = vector.shape_cast %43 : vector<8xf32> to vector<8x1xf32>
    %c51 = arith.constant 51 : index
    %c0_28 = arith.constant 0 : index
    %45 = vector.load %arg4[%c51, %c0_28] : memref<56x128xf32, #tpu.memory_space<vmem>>, vector<1x1xf32>
    %46 = vector.broadcast %45 : vector<1x1xf32> to vector<8x1xf32>
    %47 = arith.addf %44, %46 : vector<8x1xf32>
    %cst_29 = arith.constant 0.000000e+00 : f32
    %48 = vector.broadcast %cst_29 : f32 to vector<8x1xf32>
    %49 = arith.subf %48, %47 : vector<8x1xf32>
    %50 = math.exp %49 : vector<8x1xf32>
    %cst_30 = arith.constant 1.000000e+00 : f32
    %51 = vector.broadcast %cst_30 : f32 to vector<8x1xf32>
    %52 = arith.addf %51, %50 : vector<8x1xf32>
    %cst_31 = arith.constant 1.000000e+00 : f32
    %53 = vector.broadcast %cst_31 : f32 to vector<8x1xf32>
    %54 = arith.divf %53, %52 : vector<8x1xf32>
    %55 = vector.shape_cast %54 : vector<8x1xf32> to vector<8x1xf32>
    %56 = vector.broadcast %55 : vector<8x1xf32> to vector<8x128xf32>
    %c0_32 = arith.constant 0 : index
    %c0_33 = arith.constant 0 : index
    %57 = vector.load %arg5[%c0_32, %c0_33] : memref<8x128xf32, #tpu.memory_space<vmem>>, vector<8x128xf32>
    tpu.vector_store %arg5[%c0_32, %c0_33], %56 {strides = array<i32>} : memref<8x128xf32, #tpu.memory_space<vmem>>, vector<8x128xf32>,
    return
  }
}

</mosaic_0001>

<llo_original>
// kernel: dual_forward.1
$region0: #{dual_forward.1}
  #allocation0 [shape = 'u32[]', space=smem, size = 0x4, offset = 0x4, fixed_abs, tag = 'smem constant byte address 0x4 - core index']
  #allocation1 [shape = 'u32[144,128]{1,0:T(1,128)}', space=vmem, size = 0x12000, scoped, tag = 'internal scratch']
  %s0 = inlined_call_operand.vmem [shape: bf16[8,128], index: 0, kind: input, shape index: {}]
  %s1 = inlined_call_operand.vmem [shape: bf16[8,128], index: 1, kind: input, shape index: {}]
  %s2 = inlined_call_operand.vmem [shape: bf16[8,128], index: 2, kind: input, shape index: {}]
  %s3 = inlined_call_operand.vmem [shape: bf16[512,32], index: 3, kind: input, shape index: {}]
  %s4 = inlined_call_operand.vmem [shape: f32[56,128], index: 4, kind: input, shape index: {}]
  %s5 = inlined_call_operand.vmem [shape: f32[8,128], index: 5, kind: output, shape index: {}]
  %s6 = sld [smem:[#allocation0]]
  $region30: #{dual_forward.1} parent=0
    _
  %s8 = ssub.s32 1, %s6
  %s9 = scalar_select 0, %s8, %s6
  // Predicated region
  $region2: #{dual_forward.1} parent=0 // pred_check
    _
  $region3: #{dual_forward.1} parent=0 // pred_check_branch
    %11 = sbr.rel (0) target = $region5
  $region4: #{dual_forward.1} parent=0 // pred_region
    _
  $region5: #{dual_forward.1} parent=0 // pred_fallthru
    _
  // Predicated region
  $region6: #{dual_forward.1} parent=0 // pred_check
    _
  $region7: #{dual_forward.1} parent=0 // pred_check_branch
    %13 = sbr.rel (0) target = $region9
  $region8: #{dual_forward.1} parent=0 // pred_region
    _
  $region9: #{dual_forward.1} parent=0 // pred_fallthru
    _
  // Predicated region
  $region10: #{dual_forward.1} parent=0 // pred_check
    _
  $region11: #{dual_forward.1} parent=0 // pred_check_branch
    %15 = sbr.rel (0) target = $region13
  $region12: #{dual_forward.1} parent=0 // pred_region
    _
  $region13: #{dual_forward.1} parent=0 // pred_fallthru
    _
  // Predicated region
  $region14: #{dual_forward.1} parent=0 // pred_check
    _
  $region15: #{dual_forward.1} parent=0 // pred_check_branch
    %17 = sbr.rel (0) target = $region17
  $region16: #{dual_forward.1} parent=0 // pred_region
    _
  $region17: #{dual_forward.1} parent=0 // pred_fallthru
    _
  // Predicated region
  $region18: #{dual_forward.1} parent=0 // pred_check
    _
  $region19: #{dual_forward.1} parent=0 // pred_check_branch
    %19 = sbr.rel (0) target = $region21
  $region20: #{dual_forward.1} parent=0 // pred_region
    _
  $region21: #{dual_forward.1} parent=0 // pred_fallthru
    _
  %v21 = vld [vmem:[%s0] sm:$0xf]
  %v22 = vld [vmem:[%s1] sm:$0xf]
  %v23 = vld [vmem:[%s2] sm:$0xf]
  %v24 = vld [vmem:[%s3] sm:$0xf]
  %v25 = vld [vmem:[%s3 + $0x4] sm:$0xf]
  %v26 = vld [vmem:[%s3 + $0x8] sm:$0xf]
  %v27 = vld [vmem:[%s3 + $0xc] sm:$0xf]
  %v28 = vld [vmem:[%s3 + $0x10] sm:$0xf]
  %v29 = vld [vmem:[%s3 + $0x14] sm:$0xf]
  %v30 = vld [vmem:[%s3 + $0x18] sm:$0xf]
  %v31 = vld [vmem:[%s3 + $0x1c] sm:$0xf]
  %v32 = vld [vmem:[%s3 + $0x20] sm:$0xf]
  %v33 = vld [vmem:[%s3 + $0x24] sm:$0xf]
  %v34 = vld [vmem:[%s3 + $0x28] sm:$0xf]
  %v35 = vld [vmem:[%s3 + $0x2c] sm:$0xf]
  %v36 = vld [vmem:[%s3 + $0x30] sm:$0xf]
  %v37 = vld [vmem:[%s3 + $0x34] sm:$0xf]
  %v38 = vld [vmem:[%s3 + $0x38] sm:$0xf]
  %v39 = vld [vmem:[%s3 + $0x3c] sm:$0xf]
  %v56 = vunpack.c.l.b16 %v24
  %v57 = vunpack.c.l.b16 %v25
  %v58 = vunpack.c.l.b16 %v26
  %v59 = vunpack.c.l.b16 %v27
  %v60 = vunpack.c.l.b16 %v28
  %v61 = vunpack.c.l.b16 %v29
  %v62 = vunpack.c.l.b16 %v30
  %v63 = vunpack.c.l.b16 %v31
  %v64 = vunpack.c.l.b16 %v32
  %v65 = vunpack.c.l.b16 %v33
  %v66 = vunpack.c.l.b16 %v34
  %v67 = vunpack.c.l.b16 %v35
  %v68 = vunpack.c.l.b16 %v36
  %v69 = vunpack.c.l.b16 %v37
  %v70 = vunpack.c.l.b16 %v38
  %v71 = vunpack.c.l.b16 %v39
  %v72 = vpack.c.b16 %v57, %v56
  %v73 = vpack.c.b16 %v59, %v58
  %v74 = vpack.c.b16 %v61, %v60
  %v75 = vpack.c.b16 %v63, %v62
  %v76 = vpack.c.b16 %v65, %v64
  %v77 = vpack.c.b16 %v67, %v66
  %v78 = vpack.c.b16 %v69, %v68
  %v79 = vpack.c.b16 %v71, %v70
  %88 = vmatprep.subr.bf16.mxu0 0
  %89 = vmatpush1.bf16.msra.mxu0 %v79
  %90 = vmatprep.subr.bf16.mxu0 0
  %91 = vmatpush1.bf16.msra.mxu0 %v78
  %92 = vmatprep.subr.bf16.mxu0 0
  %93 = vmatpush1.bf16.msra.mxu0 %v77
  %94 = vmatprep.subr.bf16.mxu0 0
  %95 = vmatpush1.bf16.msra.mxu0 %v76
  %96 = vmatprep.subr.bf16.mxu0 0
  %97 = vmatpush1.bf16.msra.mxu0 %v75
  %98 = vmatprep.subr.bf16.mxu0 0
  %99 = vmatpush1.bf16.msra.mxu0 %v74
  %100 = vmatprep.subr.bf16.mxu0 0
  %101 = vmatpush1.bf16.msra.mxu0 %v73
  %102 = vmatprep.subr.bf16.mxu0 0
  %103 = vmatpush1.bf16.msra.mxu0 %v72
  %104 = vmatprep.subr.bf16.mxu0 0
  %105 = vmatpush2.bf16.msra.mxu0 0
  %106 = vmatprep.subr.bf16.mxu0 0
  %107 = vmatpush2.bf16.msra.mxu0 0
  %108 = vmatprep.subr.bf16.mxu0 0
  %109 = vmatpush2.bf16.msra.mxu0 0
  %110 = vmatprep.subr.bf16.mxu0 0
  %111 = vmatpush2.bf16.msra.mxu0 0
  %112 = vmatprep.subr.bf16.mxu0 0
  %113 = vmatpush2.bf16.msra.mxu0 0
  %114 = vmatprep.subr.bf16.mxu0 0
  %115 = vmatpush2.bf16.msra.mxu0 0
  %116 = vmatprep.subr.bf16.mxu0 0
  %117 = vmatpush2.bf16.msra.mxu0 0
  %118 = vmatprep.subr.bf16.mxu0 0
  %119 = vmatpush2.bf16.msra.mxu0 0
  %120 = vmatprep.mubr.bf16.mxu0 0
  %121 = vmatmul.mubr.bf16.gmra.mxu0 %v21
  %v122 = vpop.f32.mrf.mxu0
  %v123 = vadd.f32 0.0, %v122
  %v124 = vpop.f32.mrf.mxu0
  %v125 = vpop.f32.mrf.mxu0
  %v126 = vpop.f32.mrf.mxu0
  %127 = vdwg.mxu0
  %v128 = vld [vmem:[%s3 + $0x40] sm:$0xf]
  %v129 = vld [vmem:[%s3 + $0x44] sm:$0xf]
  %v130 = vld [vmem:[%s3 + $0x48] sm:$0xf]
  %v131 = vld [vmem:[%s3 + $0x4c] sm:$0xf]
  %v132 = vld [vmem:[%s3 + $0x50] sm:$0xf]
  %v133 = vld [vmem:[%s3 + $0x54] sm:$0xf]
  %v134 = vld [vmem:[%s3 + $0x58] sm:$0xf]
  %v135 = vld [vmem:[%s3 + $0x5c] sm:$0xf]
  %v136 = vld [vmem:[%s3 + $0x60] sm:$0xf]
  %v137 = vld [vmem:[%s3 + $0x64] sm:$0xf]
  %v138 = vld [vmem:[%s3 + $0x68] sm:$0xf]
  %v139 = vld [vmem:[%s3 + $0x6c] sm:$0xf]
  %v140 = vld [vmem:[%s3 + $0x70] sm:$0xf]
  %v141 = vld [vmem:[%s3 + $0x74] sm:$0xf]
  %v142 = vld [vmem:[%s3 + $0x78] sm:$0xf]
  %v143 = vld [vmem:[%s3 + $0x7c] sm:$0xf]
  %v160 = vunpack.c.l.b16 %v128
  %v161 = vunpack.c.l.b16 %v129
  %v162 = vunpack.c.l.b16 %v130
  %v163 = vunpack.c.l.b16 %v131
  %v164 = vunpack.c.l.b16 %v132
  %v165 = vunpack.c.l.b16 %v133
  %v166 = vunpack.c.l.b16 %v134
  %v167 = vunpack.c.l.b16 %v135
  %v168 = vunpack.c.l.b16 %v136
  %v169 = vunpack.c.l.b16 %v137
  %v170 = vunpack.c.l.b16 %v138
  %v171 = vunpack.c.l.b16 %v139
  %v172 = vunpack.c.l.b16 %v140
  %v173 = vunpack.c.l.b16 %v141
  %v174 = vunpack.c.l.b16 %v142
  %v175 = vunpack.c.l.b16 %v143
  %v176 = vpack.c.b16 %v161, %v160
  %v177 = vpack.c.b16 %v163, %v162
  %v178 = vpack.c.b16 %v165, %v164
  %v179 = vpack.c.b16 %v167, %v166
  %v180 = vpack.c.b16 %v169, %v168
  %v181 = vpack.c.b16 %v171, %v170
  %v182 = vpack.c.b16 %v173, %v172
  %v183 = vpack.c.b16 %v175, %v174
  %192 = vmatprep.subr.bf16.mxu0 0
  %193 = vmatpush1.bf16.msra.mxu0 %v183
  %194 = vmatprep.subr.bf16.mxu0 0
  %195 = vmatpush1.bf16.msra.mxu0 %v182
  %196 = vmatprep.subr.bf16.mxu0 0
  %197 = vmatpush1.bf16.msra.mxu0 %v181
  %198 = vmatprep.subr.bf16.mxu0 0
  %199 = vmatpush1.bf16.msra.mxu0 %v180
  %200 = vmatprep.subr.bf16.mxu0 0
  %201 = vmatpush1.bf16.msra.mxu0 %v179
  %202 = vmatprep.subr.bf16.mxu0 0
  %203 = vmatpush1.bf16.msra.mxu0 %v178
  %204 = vmatprep.subr.bf16.mxu0 0
  %205 = vmatpush1.bf16.msra.mxu0 %v177
  %206 = vmatprep.subr.bf16.mxu0 0
  %207 = vmatpush1.bf16.msra.mxu0 %v176
  %208 = vmatprep.subr.bf16.mxu0 0
  %209 = vmatpush2.bf16.msra.mxu0 0
  %210 = vmatprep.subr.bf16.mxu0 0
  %211 = vmatpush2.bf16.msra.mxu0 0
  %212 = vmatprep.subr.bf16.mxu0 0
  %213 = vmatpush2.bf16.msra.mxu0 0
  %214 = vmatprep.subr.bf16.mxu0 0
  %215 = vmatpush2.bf16.msra.mxu0 0
  %216 = vmatprep.subr.bf16.mxu0 0
  %217 = vmatpush2.bf16.msra.mxu0 0
  %218 = vmatprep.subr.bf16.mxu0 0
  %219 = vmatpush2.bf16.msra.mxu0 0
  %220 = vmatprep.subr.bf16.mxu0 0
  %221 = vmatpush2.bf16.msra.mxu0 0
  %222 = vmatprep.subr.bf16.mxu0 0
  %223 = vmatpush2.bf16.msra.mxu0 0
  %224 = vmatprep.mubr.bf16.mxu0 0
  %225 = vmatmul.mubr.bf16.gmra.mxu0 %v22
  %v226 = vpop.f32.mrf.mxu0
  %v227 = vadd.f32 0.0, %v226
  %v228 = vpop.f32.mrf.mxu0
  %v229 = vpop.f32.mrf.mxu0
  %v230 = vpop.f32.mrf.mxu0
  %231 = vdwg.mxu0
  %v232 = vld [vmem:[%s4] sm:$0xff]
  %vm233 = vcmask 261120
  %v235 = vsel %vm233, %v123, 0
  %v238 = vsel %vm233, %v227, 0
  %240 = vmatprep.subr.mxu0 0.0
  %241 = vmatpush1.xpose.msra.mxu0 0.0
  %242 = vmatprep.subr.mxu0 0.0
  %243 = vmatpush1.xpose.msra.mxu0 0.0
  %244 = vmatprep.subr.mxu0 0.0
  %245 = vmatpush1.xpose.msra.mxu0 0.0
  %246 = vmatprep.subr.mxu0 0.0
  %247 = vmatpush1.xpose.msra.mxu0 0.0
  %248 = vmatprep.subr.mxu0 0.0
  %249 = vmatpush1.xpose.msra.mxu0 0.0
  %250 = vmatprep.subr.mxu0 0.0
  %251 = vmatpush1.xpose.msra.mxu0 0.0
  %252 = vmatprep.subr.mxu0 0.0
  %253 = vmatpush1.xpose.msra.mxu0 0.0
  %254 = vmatprep.subr.mxu0 0.0
  %255 = vmatpush1.xpose.msra.mxu0 0.0
  %256 = vmatprep.subr.mxu0 0.0
  %257 = vmatpush1.xpose.msra.mxu0 0.0
  %258 = vmatprep.subr.mxu0 0.0
  %259 = vmatpush1.xpose.msra.mxu0 0.0
  %260 = vmatprep.subr.mxu0 0.0
  %261 = vmatpush1.xpose.msra.mxu0 0.0
  %262 = vmatprep.subr.mxu0 0.0
  %263 = vmatpush1.xpose.msra.mxu0 0.0
  %264 = vmatprep.subr.mxu0 0.0
  %265 = vmatpush1.xpose.msra.mxu0 0.0
  %266 = vmatprep.subr.mxu0 0.0
  %267 = vmatpush1.xpose.msra.mxu0 0.0
  %268 = vmatprep.subr.mxu0 0.0
  %269 = vmatpush1.xpose.msra.mxu0 0.0
  %270 = vmatprep.subr.mxu0 0.0
  %271 = vmatpush1.xpose.msra.mxu0 %v238
  %272 = vmatprep.subr.mxu0 0.0
  %273 = vmatpush2.xpose.msra.mxu0 0.0
  %274 = vmatprep.subr.mxu0 0.0
  %275 = vmatpush2.xpose.msra.mxu0 0.0
  %276 = vmatprep.subr.mxu0 0.0
  %277 = vmatpush2.xpose.msra.mxu0 0.0
  %278 = vmatprep.subr.mxu0 0.0
  %279 = vmatpush2.xpose.msra.mxu0 0.0
  %280 = vmatprep.subr.mxu0 0.0
  %281 = vmatpush2.xpose.msra.mxu0 0.0
  %282 = vmatprep.subr.mxu0 0.0
  %283 = vmatpush2.xpose.msra.mxu0 0.0
  %284 = vmatprep.subr.mxu0 0.0
  %285 = vmatpush2.xpose.msra.mxu0 0.0
  %286 = vmatprep.subr.mxu0 0.0
  %287 = vmatpush2.xpose.msra.mxu0 0.0
  %288 = vmatprep.subr.mxu0 0.0
  %289 = vmatpush2.xpose.msra.mxu0 0.0
  %290 = vmatprep.subr.mxu0 0.0
  %291 = vmatpush2.xpose.msra.mxu0 0.0
  %292 = vmatprep.subr.mxu0 0.0
  %293 = vmatpush2.xpose.msra.mxu0 0.0
  %294 = vmatprep.subr.mxu0 0.0
  %295 = vmatpush2.xpose.msra.mxu0 0.0
  %296 = vmatprep.subr.mxu0 0.0
  %297 = vmatpush2.xpose.msra.mxu0 0.0
  %298 = vmatprep.subr.mxu0 0.0
  %299 = vmatpush2.xpose.msra.mxu0 0.0
  %300 = vmatprep.subr.mxu0 0.0
  %301 = vmatpush2.xpose.msra.mxu0 0.0
  %302 = vmatprep.subr.mxu0 0.0
  %303 = vmatpush2.xpose.msra.mxu0 0.0
  %304 = vmatprep.mubr.f32.mxu0 0.0
  %305 = vmatmul.mubr.f32.gmra.mxu0 %v235
  %v306 = vpop.f32.mrf.mxu0
  %v307 = vadd.f32 %v232, %v306
  %v308 = vpop.f32.mrf.mxu0
  %309 = vdwg.mxu0
  %vm310 = vcmask 64512
  %v311 = vsel %vm310, %v307, -inf
  %312 = vmax.xlane.f32.xlu0 %v311
  %v313 = vpop.xlane.xlu0 %312
  %v314 = vsub.f32 %v307, %v313
  %v315 = vmul.f32 %v314, 1.442695
  %v316 = vpow.pop %v315
  %v317 = vsel %vm310, %v316, 0.0
  %318 = vadd.xlane.f32.xlu0 %v317
  %v319 = vpop.xlane.xlu0 %318
  %v320 = vrcp.pop %v319
  %v321 = vmul.f32 %v316, %v320
  %v322 = vpack.c.bf16 %v321, %v321
  %v324 = vsel %vm310, %v322, 0
  %vm326 = vcmask 1043456
  %v328 = vsel %vm326, %v23, 0
  %330 = vmatprep.subr.bf16.mxu0 0
  %331 = vmatpush1.bf16.msra.mxu0 0
  %332 = vmatprep.subr.bf16.mxu0 0
  %333 = vmatpush1.bf16.msra.mxu0 0
  %334 = vmatprep.subr.bf16.mxu0 0
  %335 = vmatpush1.bf16.msra.mxu0 0
  %336 = vmatprep.subr.bf16.mxu0 0
  %337 = vmatpush1.bf16.msra.mxu0 0
  %338 = vmatprep.subr.bf16.mxu0 0
  %339 = vmatpush1.bf16.msra.mxu0 0
  %340 = vmatprep.subr.bf16.mxu0 0
  %341 = vmatpush1.bf16.msra.mxu0 0
  %342 = vmatprep.subr.bf16.mxu0 0
  %343 = vmatpush1.bf16.msra.mxu0 0
  %344 = vmatprep.subr.bf16.mxu0 0
  %345 = vmatpush1.bf16.msra.mxu0 %v328
  %346 = vmatprep.subr.bf16.mxu0 0
  %347 = vmatpush2.bf16.msra.mxu0 0
  %348 = vmatprep.subr.bf16.mxu0 0
  %349 = vmatpush2.bf16.msra.mxu0 0
  %350 = vmatprep.subr.bf16.mxu0 0
  %351 = vmatpush2.bf16.msra.mxu0 0
  %352 = vmatprep.subr.bf16.mxu0 0
  %353 = vmatpush2.bf16.msra.mxu0 0
  %354 = vmatprep.subr.bf16.mxu0 0
  %355 = vmatpush2.bf16.msra.mxu0 0
  %356 = vmatprep.subr.bf16.mxu0 0
  %357 = vmatpush2.bf16.msra.mxu0 0
  %358 = vmatprep.subr.bf16.mxu0 0
  %359 = vmatpush2.bf16.msra.mxu0 0
  %360 = vmatprep.subr.bf16.mxu0 0
  %361 = vmatpush2.bf16.msra.mxu0 0
  %362 = vmatprep.mubr.bf16.mxu0 0
  %363 = vmatmul.mubr.bf16.gmra.mxu0 %v324
  %v364 = vpop.f32.mrf.mxu0
  %v365 = vadd.f32 0.0, %v364
  %v366 = vpop.f32.mrf.mxu0
  %v367 = vpop.f32.mrf.mxu0
  %v368 = vpop.f32.mrf.mxu0
  %369 = vdwg.mxu0
  %v370 = vld [vmem:[%s3 + $0x80] sm:$0xf]
  %v371 = vld [vmem:[%s3 + $0x84] sm:$0xf]
  %v372 = vld [vmem:[%s3 + $0x88] sm:$0xf]
  %v373 = vld [vmem:[%s3 + $0x8c] sm:$0xf]
  %v374 = vld [vmem:[%s3 + $0x90] sm:$0xf]
  %v375 = vld [vmem:[%s3 + $0x94] sm:$0xf]
  %v376 = vld [vmem:[%s3 + $0x98] sm:$0xf]
  %v377 = vld [vmem:[%s3 + $0x9c] sm:$0xf]
  %v378 = vld [vmem:[%s3 + $0xa0] sm:$0xf]
  %v379 = vld [vmem:[%s3 + $0xa4] sm:$0xf]
  %v380 = vld [vmem:[%s3 + $0xa8] sm:$0xf]
  %v381 = vld [vmem:[%s3 + $0xac] sm:$0xf]
  %v382 = vld [vmem:[%s3 + $0xb0] sm:$0xf]
  %v383 = vld [vmem:[%s3 + $0xb4] sm:$0xf]
  %v384 = vld [vmem:[%s3 + $0xb8] sm:$0xf]
  %v385 = vld [vmem:[%s3 + $0xbc] sm:$0xf]
  %v386 = vpack.c.bf16 %v365, %v365
  %v387 = vld [vmem:[%s3 + $0xc0] sm:$0xf]
  %v388 = vld [vmem:[%s3 + $0xc4] sm:$0xf]
  %v389 = vld [vmem:[%s3 + $0xc8] sm:$0xf]
  %v390 = vld [vmem:[%s3 + $0xcc] sm:$0xf]
  %v391 = vld [vmem:[%s3 + $0xd0] sm:$0xf]
  %v392 = vld [vmem:[%s3 + $0xd4] sm:$0xf]
  %v393 = vld [vmem:[%s3 + $0xd8] sm:$0xf]
  %v394 = vld [vmem:[%s3 + $0xdc] sm:$0xf]
  %v395 = vld [vmem:[%s3 + $0xe0] sm:$0xf]
  %v396 = vld [vmem:[%s3 + $0xe4] sm:$0xf]
  %v397 = vld [vmem:[%s3 + $0xe8] sm:$0xf]
  %v398 = vld [vmem:[%s3 + $0xec] sm:$0xf]
  %v399 = vld [vmem:[%s3 + $0xf0] sm:$0xf]
  %v400 = vld [vmem:[%s3 + $0xf4] sm:$0xf]
  %v401 = vld [vmem:[%s3 + $0xf8] sm:$0xf]
  %v402 = vld [vmem:[%s3 + $0xfc] sm:$0xf]
  %v419 = vunpack.c.l.b16 %v387
  %v420 = vunpack.c.l.b16 %v388
  %v421 = vunpack.c.l.b16 %v389
  %v422 = vunpack.c.l.b16 %v390
  %v423 = vunpack.c.l.b16 %v391
  %v424 = vunpack.c.l.b16 %v392
  %v425 = vunpack.c.l.b16 %v393
  %v426 = vunpack.c.l.b16 %v394
  %v427 = vunpack.c.l.b16 %v395
  %v428 = vunpack.c.l.b16 %v396
  %v429 = vunpack.c.l.b16 %v397
  %v430 = vunpack.c.l.b16 %v398
  %v431 = vunpack.c.l.b16 %v399
  %v432 = vunpack.c.l.b16 %v400
  %v433 = vunpack.c.l.b16 %v401
  %v434 = vunpack.c.l.b16 %v402
  %v435 = vpack.c.b16 %v420, %v419
  %v436 = vpack.c.b16 %v422, %v421
  %v437 = vpack.c.b16 %v424, %v423
  %v438 = vpack.c.b16 %v426, %v425
  %v439 = vpack.c.b16 %v428, %v427
  %v440 = vpack.c.b16 %v430, %v429
  %v441 = vpack.c.b16 %v432, %v431
  %v442 = vpack.c.b16 %v434, %v433
  %451 = vmatprep.subr.bf16.mxu0 0
  %452 = vmatpush1.bf16.msra.mxu0 %v442
  %453 = vmatprep.subr.bf16.mxu0 0
  %454 = vmatpush1.bf16.msra.mxu0 %v441
  %455 = vmatprep.subr.bf16.mxu0 0
  %456 = vmatpush1.bf16.msra.mxu0 %v440
  %457 = vmatprep.subr.bf16.mxu0 0
  %458 = vmatpush1.bf16.msra.mxu0 %v439
  %459 = vmatprep.subr.bf16.mxu0 0
  %460 = vmatpush1.bf16.msra.mxu0 %v438
  %461 = vmatprep.subr.bf16.mxu0 0
  %462 = vmatpush1.bf16.msra.mxu0 %v437
  %463 = vmatprep.subr.bf16.mxu0 0
  %464 = vmatpush1.bf16.msra.mxu0 %v436
  %465 = vmatprep.subr.bf16.mxu0 0
  %466 = vmatpush1.bf16.msra.mxu0 %v435
  %467 = vmatprep.subr.bf16.mxu0 0
  %468 = vmatpush2.bf16.msra.mxu0 0
  %469 = vmatprep.subr.bf16.mxu0 0
  %470 = vmatpush2.bf16.msra.mxu0 0
  %471 = vmatprep.subr.bf16.mxu0 0
  %472 = vmatpush2.bf16.msra.mxu0 0
  %473 = vmatprep.subr.bf16.mxu0 0
  %474 = vmatpush2.bf16.msra.mxu0 0
  %475 = vmatprep.subr.bf16.mxu0 0
  %476 = vmatpush2.bf16.msra.mxu0 0
  %477 = vmatprep.subr.bf16.mxu0 0
  %478 = vmatpush2.bf16.msra.mxu0 0
  %479 = vmatprep.subr.bf16.mxu0 0
  %480 = vmatpush2.bf16.msra.mxu0 0
  %481 = vmatprep.subr.bf16.mxu0 0
  %482 = vmatpush2.bf16.msra.mxu0 0
  %483 = vmatprep.mubr.bf16.mxu0 0
  %484 = vmatmul.mubr.bf16.gmra.mxu0 %v386
  %v485 = vpop.f32.mrf.mxu0
  %v486 = vadd.f32 0.0, %v485
  %v487 = vpop.f32.mrf.mxu0
  %v488 = vpop.f32.mrf.mxu0
  %v489 = vpop.f32.mrf.mxu0
  %490 = vdwg.mxu0
  %v507 = vunpack.c.l.b16 %v370
  %v508 = vunpack.c.l.b16 %v371
  %v509 = vunpack.c.l.b16 %v372
  %v510 = vunpack.c.l.b16 %v373
  %v511 = vunpack.c.l.b16 %v374
  %v512 = vunpack.c.l.b16 %v375
  %v513 = vunpack.c.l.b16 %v376
  %v514 = vunpack.c.l.b16 %v377
  %v515 = vunpack.c.l.b16 %v378
  %v516 = vunpack.c.l.b16 %v379
  %v517 = vunpack.c.l.b16 %v380
  %v518 = vunpack.c.l.b16 %v381
  %v519 = vunpack.c.l.b16 %v382
  %v520 = vunpack.c.l.b16 %v383
  %v521 = vunpack.c.l.b16 %v384
  %v522 = vunpack.c.l.b16 %v385
  %v523 = vpack.c.b16 %v508, %v507
  %v524 = vpack.c.b16 %v510, %v509
  %v525 = vpack.c.b16 %v512, %v511
  %v526 = vpack.c.b16 %v514, %v513
  %v527 = vpack.c.b16 %v516, %v515
  %v528 = vpack.c.b16 %v518, %v517
  %v529 = vpack.c.b16 %v520, %v519
  %v530 = vpack.c.b16 %v522, %v521
  %539 = vmatprep.subr.bf16.mxu0 0
  %540 = vmatpush1.bf16.msra.mxu0 %v530
  %541 = vmatprep.subr.bf16.mxu0 0
  %542 = vmatpush1.bf16.msra.mxu0 %v529
  %543 = vmatprep.subr.bf16.mxu0 0
  %544 = vmatpush1.bf16.msra.mxu0 %v528
  %545 = vmatprep.subr.bf16.mxu0 0
  %546 = vmatpush1.bf16.msra.mxu0 %v527
  %547 = vmatprep.subr.bf16.mxu0 0
  %548 = vmatpush1.bf16.msra.mxu0 %v526
  %549 = vmatprep.subr.bf16.mxu0 0
  %550 = vmatpush1.bf16.msra.mxu0 %v525
  %551 = vmatprep.subr.bf16.mxu0 0
  %552 = vmatpush1.bf16.msra.mxu0 %v524
  %553 = vmatprep.subr.bf16.mxu0 0
  %554 = vmatpush1.bf16.msra.mxu0 %v523
  %555 = vmatprep.subr.bf16.mxu0 0
  %556 = vmatpush2.bf16.msra.mxu0 0
  %557 = vmatprep.subr.bf16.mxu0 0
  %558 = vmatpush2.bf16.msra.mxu0 0
  %559 = vmatprep.subr.bf16.mxu0 0
  %560 = vmatpush2.bf16.msra.mxu0 0
  %561 = vmatprep.subr.bf16.mxu0 0
  %562 = vmatpush2.bf16.msra.mxu0 0
  %563 = vmatprep.subr.bf16.mxu0 0
  %564 = vmatpush2.bf16.msra.mxu0 0
  %565 = vmatprep.subr.bf16.mxu0 0
  %566 = vmatpush2.bf16.msra.mxu0 0
  %567 = vmatprep.subr.bf16.mxu0 0
  %568 = vmatpush2.bf16.msra.mxu0 0
  %569 = vmatprep.subr.bf16.mxu0 0
  %570 = vmatpush2.bf16.msra.mxu0 0
  %571 = vmatprep.mubr.bf16.mxu0 0
  %572 = vmatmul.mubr.bf16.gmra.mxu0 %v21
  %v573 = vpop.f32.mrf.mxu0
  %v574 = vadd.f32 %v486, %v573
  %v575 = vpop.f32.mrf.mxu0
  %v576 = vpop.f32.mrf.mxu0
  %v577 = vpop.f32.mrf.mxu0
  %578 = vdwg.mxu0
  %v579 = vld [vmem:[%s4 + $0x30] sm:$0x1]
  %v580 = vlaneseq
  %v581 = vshrl.u32 %v580, 7
  %v582 = vsub.s32 0, %v581
  %v583 = vrot.slane %v579, %v582
  %v584 = vadd.f32 %v574, %v583
  %v585 = vld [vmem:[%s4 + $0x8] sm:$0xff]
  %v587 = vsel %vm310, %v585, 0
  %589 = vmatprep.subr.mxu0 0.0
  %590 = vmatpush1.msra.mxu0 0.0
  %591 = vmatprep.subr.mxu0 0.0
  %592 = vmatpush1.msra.mxu0 0.0
  %593 = vmatprep.subr.mxu0 0.0
  %594 = vmatpush1.msra.mxu0 0.0
  %595 = vmatprep.subr.mxu0 0.0
  %596 = vmatpush1.msra.mxu0 0.0
  %597 = vmatprep.subr.mxu0 0.0
  %598 = vmatpush1.msra.mxu0 0.0
  %599 = vmatprep.subr.mxu0 0.0
  %600 = vmatpush1.msra.mxu0 0.0
  %601 = vmatprep.subr.mxu0 0.0
  %602 = vmatpush1.msra.mxu0 0.0
  %603 = vmatprep.subr.mxu0 0.0
  %604 = vmatpush1.msra.mxu0 0.0
  %605 = vmatprep.subr.mxu0 0.0
  %606 = vmatpush1.msra.mxu0 0.0
  %607 = vmatprep.subr.mxu0 0.0
  %608 = vmatpush1.msra.mxu0 0.0
  %609 = vmatprep.subr.mxu0 0.0
  %610 = vmatpush1.msra.mxu0 0.0
  %611 = vmatprep.subr.mxu0 0.0
  %612 = vmatpush1.msra.mxu0 0.0
  %613 = vmatprep.subr.mxu0 0.0
  %614 = vmatpush1.msra.mxu0 0.0
  %615 = vmatprep.subr.mxu0 0.0
  %616 = vmatpush1.msra.mxu0 0.0
  %617 = vmatprep.subr.mxu0 0.0
  %618 = vmatpush1.msra.mxu0 0.0
  %619 = vmatprep.subr.mxu0 0.0
  %620 = vmatpush1.msra.mxu0 %v584
  %621 = vmatprep.subr.mxu0 0.0
  %622 = vmatpush2.msra.mxu0 0.0
  %623 = vmatprep.subr.mxu0 0.0
  %624 = vmatpush2.msra.mxu0 0.0
  %625 = vmatprep.subr.mxu0 0.0
  %626 = vmatpush2.msra.mxu0 0.0
  %627 = vmatprep.subr.mxu0 0.0
  %628 = vmatpush2.msra.mxu0 0.0
  %629 = vmatprep.subr.mxu0 0.0
  %630 = vmatpush2.msra.mxu0 0.0
  %631 = vmatprep.subr.mxu0 0.0
  %632 = vmatpush2.msra.mxu0 0.0
  %633 = vmatprep.subr.mxu0 0.0
  %634 = vmatpush2.msra.mxu0 0.0
  %635 = vmatprep.subr.mxu0 0.0
  %636 = vmatpush2.msra.mxu0 0.0
  %637 = vmatprep.subr.mxu0 0.0
  %638 = vmatpush2.msra.mxu0 0.0
  %639 = vmatprep.subr.mxu0 0.0
  %640 = vmatpush2.msra.mxu0 0.0
  %641 = vmatprep.subr.mxu0 0.0
  %642 = vmatpush2.msra.mxu0 0.0
  %643 = vmatprep.subr.mxu0 0.0
  %644 = vmatpush2.msra.mxu0 0.0
  %645 = vmatprep.subr.mxu0 0.0
  %646 = vmatpush2.msra.mxu0 0.0
  %647 = vmatprep.subr.mxu0 0.0
  %648 = vmatpush2.msra.mxu0 0.0
  %649 = vmatprep.subr.mxu0 0.0
  %650 = vmatpush2.msra.mxu0 0.0
  %651 = vmatprep.subr.mxu0 0.0
  %652 = vmatpush2.msra.mxu0 0.0
  %653 = vmatprep.mubr.f32.mxu0 0.0
  %654 = vmatmul.mubr.f32.gmra.mxu0 %v587
  %v655 = vpop.f32.mrf.mxu0
  %v656 = vadd.f32 0.0, %v655
  %v657 = vpop.f32.mrf.mxu0
  %658 = vdwg.mxu0
  %v659 = vld [vmem:[%s4 + $0x10] sm:$0xff]
  %v660 = vld [vmem:[%s4 + $0x18] sm:$0xff]
  %v661 = vld [vmem:[%s4 + $0x20] sm:$0xff]
  %v662 = vld [vmem:[%s4 + $0x28] sm:$0xff]
  %v663 = vld [vmem:[%s4 + $0x31] sm:$0x1]
  %v664 = vlaneseq
  %v665 = vshrl.u32 %v664, 7
  %v666 = vsub.s32 0, %v665
  %v667 = vrot.slane %v663, %v666
  %v669 = vsel %vm233, %v656, 0
  %671 = vmatprep.subr.mxu0 0.0
  %672 = vmatpush1.msra.mxu0 0.0
  %673 = vmatprep.subr.mxu0 0.0
  %674 = vmatpush1.msra.mxu0 0.0
  %675 = vmatprep.subr.mxu0 0.0
  %676 = vmatpush1.msra.mxu0 0.0
  %677 = vmatprep.subr.mxu0 0.0
  %678 = vmatpush1.msra.mxu0 0.0
  %679 = vmatprep.subr.mxu0 0.0
  %680 = vmatpush1.msra.mxu0 0.0
  %681 = vmatprep.subr.mxu0 0.0
  %682 = vmatpush1.msra.mxu0 0.0
  %683 = vmatprep.subr.mxu0 0.0
  %684 = vmatpush1.msra.mxu0 0.0
  %685 = vmatprep.subr.mxu0 0.0
  %686 = vmatpush1.msra.mxu0 0.0
  %687 = vmatprep.subr.mxu0 0.0
  %688 = vmatpush1.msra.mxu0 0.0
  %689 = vmatprep.subr.mxu0 0.0
  %690 = vmatpush1.msra.mxu0 0.0
  %691 = vmatprep.subr.mxu0 0.0
  %692 = vmatpush1.msra.mxu0 0.0
  %693 = vmatprep.subr.mxu0 0.0
  %694 = vmatpush1.msra.mxu0 0.0
  %695 = vmatprep.subr.mxu0 0.0
  %696 = vmatpush1.msra.mxu0 %v662
  %697 = vmatprep.subr.mxu0 0.0
  %698 = vmatpush1.msra.mxu0 %v661
  %699 = vmatprep.subr.mxu0 0.0
  %700 = vmatpush1.msra.mxu0 %v660
  %701 = vmatprep.subr.mxu0 0.0
  %702 = vmatpush1.msra.mxu0 %v659
  %703 = vmatprep.subr.mxu0 0.0
  %704 = vmatpush2.msra.mxu0 0.0
  %705 = vmatprep.subr.mxu0 0.0
  %706 = vmatpush2.msra.mxu0 0.0
  %707 = vmatprep.subr.mxu0 0.0
  %708 = vmatpush2.msra.mxu0 0.0
  %709 = vmatprep.subr.mxu0 0.0
  %710 = vmatpush2.msra.mxu0 0.0
  %711 = vmatprep.subr.mxu0 0.0
  %712 = vmatpush2.msra.mxu0 0.0
  %713 = vmatprep.subr.mxu0 0.0
  %714 = vmatpush2.msra.mxu0 0.0
  %715 = vmatprep.subr.mxu0 0.0
  %716 = vmatpush2.msra.mxu0 0.0
  %717 = vmatprep.subr.mxu0 0.0
  %718 = vmatpush2.msra.mxu0 0.0
  %719 = vmatprep.subr.mxu0 0.0
  %720 = vmatpush2.msra.mxu0 0.0
  %721 = vmatprep.subr.mxu0 0.0
  %722 = vmatpush2.msra.mxu0 0.0
  %723 = vmatprep.subr.mxu0 0.0
  %724 = vmatpush2.msra.mxu0 0.0
  %725 = vmatprep.subr.mxu0 0.0
  %726 = vmatpush2.msra.mxu0 0.0
  %727 = vmatprep.subr.mxu0 0.0
  %728 = vmatpush2.msra.mxu0 0.0
  %729 = vmatprep.subr.mxu0 0.0
  %730 = vmatpush2.msra.mxu0 0.0
  %731 = vmatprep.subr.mxu0 0.0
  %732 = vmatpush2.msra.mxu0 0.0
  %733 = vmatprep.subr.mxu0 0.0
  %734 = vmatpush2.msra.mxu0 0.0
  %735 = vmatprep.mubr.f32.mxu0 0.0
  %736 = vmatmul.mubr.f32.gmra.mxu0 %v669
  %v737 = vpop.f32.mrf.mxu0
  %v738 = vadd.f32 %v667, %v737
  %v739 = vpop.f32.mrf.mxu0
  %740 = vdwg.mxu0
  %v741 = vmax.f32 %v738, 0.0
  %v742 = vld [vmem:[%s4 + $0x32] sm:$0x1]
  %v743 = vlaneseq
  %v744 = vshrl.u32 %v743, 7
  %v745 = vsub.s32 0, %v744
  %v746 = vrot.slane %v742, %v745
  %v747 = vmul.f32 %v741, %v746
  %vm748 = vcmask 523264
  %v749 = vsel %vm748, %v747, 0.0
  %750 = vadd.xlane.f32.xlu0 %v749
  %v751 = vpop.xlane.xlu0 %750
  %v752 = vld [vmem:[%s4 + $0x33] sm:$0x1]
  %v753 = vlaneseq
  %v754 = vshrl.u32 %v753, 7
  %v755 = vsub.s32 0, %v754
  %v756 = vrot.slane %v752, %v755
  %v757 = vadd.f32 %v751, %v756
  %v758 = vsub.f32 0.0, %v757
  %v759 = vmul.f32 %v758, 1.442695
  %v760 = vpow.pop %v759
  %v761 = vadd.f32 %v760, 1.0
  %v762 = vrcp.pop %v761
  %v763 = vmul.f32 1.0, %v762
  %765 = vset.pattern.permute.xlu0 0
  %766 = vperm.xlu0 %765, %v763
  %v767 = vpop.permute.xlu0 %766
  %769 = vst [vmem:[%s5] sm:$0xff] %v767
  // Predicated region
  $region22: #{dual_forward.1} parent=0 // pred_check
    _
  $region23: #{dual_forward.1} parent=0 // pred_check_branch
    %771 = sbr.rel (0) target = $region25
  $region24: #{dual_forward.1} parent=0 // pred_region
    _
  $region25: #{dual_forward.1} parent=0 // pred_fallthru
    _
  // Predicated region
  $region26: #{dual_forward.1} parent=0 // pred_check
    _
  $region27: #{dual_forward.1} parent=0 // pred_check_branch
    %773 = sbr.rel (0) target = $region29
  $region28: #{dual_forward.1} parent=0 // pred_region
    _
  $region29: #{dual_forward.1} parent=0 // pred_fallthru
    _

</llo_original>
